<compile_context>
chip_gen: v7x
topology: tpu7x:2x2x1
jax: 0.10.0
libtpu: 0.0.40
codegen_flags: <defaults>
</compile_context>

<pallas_src>
import jax
import jax.numpy as jnp
from jax.experimental import pallas as pl
from jax.experimental.pallas import tpu as pltpu


def mlp_kernel(x_ref, w1_ref, b1_ref, w2_ref, b2_ref, o_ref):
    # x arrives f32; cast to bf16 on the VPU (hidden under MXU slack).
    x = x_ref[...].astype(jnp.bfloat16)
    # hidden = relu(x @ W1 + b1)   -- bf16 MXU operands, f32 accumulation / bias / relu
    h = jnp.dot(x, w1_ref[...], preferred_element_type=jnp.float32)
    h = jnp.maximum(h + b1_ref[...], 0.0)
    # predict = h @ W2 + b2        -- no activation, matches the PyTorch forward
    y = jnp.dot(h.astype(jnp.bfloat16), w2_ref[...], preferred_element_type=jnp.float32)
    o_ref[...] = (y + b2_ref[...]).astype(o_ref.dtype)


def _round_up(v, m):
    return (v + m - 1) // m * m


def _cdiv(a, b):
    return -(-a // b)


def _vmem_estimate(tb, f_p, h_p, o_p):
    """Rough per-step VMEM footprint (bytes) for the given batch tile."""
    weights = 2 * (f_p * h_p + h_p * o_p) * 2 + 2 * (h_p + o_p) * 4  # dbl-buffered bf16 W, f32 b
    io = 2 * tb * f_p * 4 + 2 * tb * o_p * 4                         # dbl-buffered x / out (f32)
    live = tb * f_p * 2 + tb * h_p * (4 + 2) + tb * o_p * 4          # bf16 x, f32+bf16 h, f32 y
    return weights + io + live


def _choose_tb(batch, f_p, h_p, o_p, vmem_budget_bytes):
    # <=512 rows/tile, >=2 grid steps when batch is big enough (v7x has 2 TCs and
    # dimension_semantics=("parallel",) only shards grid steps), balanced tiles so
    # batch padding waste stays within one 8-row sublane group.
    n_tiles = max(_cdiv(batch, 512), 2 if batch > 8 else 1)
    tb = _round_up(_cdiv(batch, n_tiles), 8)
    while tb > 8 and _vmem_estimate(tb, f_p, h_p, o_p) > vmem_budget_bytes:
        tb = _round_up(tb // 2, 8)
    return tb


def prepare_params(w1, b1, w2, b2):
    """One-time weight prep (hoisted out of the per-call path).

    Pads lane dims to multiples of 128 and casts MXU operands to bf16; biases stay
    f32 (added post-accumulation). Zero-padding keeps padded output lanes exact.
    """
    n_feature, n_hidden = w1.shape
    n_output = w2.shape[1]
    f_p = _round_up(n_feature, 128)
    h_p = _round_up(n_hidden, 128)
    o_p = _round_up(n_output, 128)
    w1_p = jnp.pad(w1, ((0, f_p - n_feature), (0, h_p - n_hidden))).astype(jnp.bfloat16)
    w2_p = jnp.pad(w2, ((0, h_p - n_hidden), (0, o_p - n_output))).astype(jnp.bfloat16)
    b1_p = jnp.pad(b1, (0, h_p - n_hidden)).reshape(1, h_p).astype(jnp.float32)
    b2_p = jnp.pad(b2, (0, o_p - n_output)).reshape(1, o_p).astype(jnp.float32)
    return dict(w1=w1_p, b1=b1_p, w2=w2_p, b2=b2_p,
                n_feature=n_feature, n_hidden=n_hidden, n_output=n_output)


def net_forward(x, params):
    """Fused MLP forward: relu(x @ W1 + b1) @ W2 + b2.

    x : (batch, n_feature) f32.  params : output of prepare_params().
    Returns (batch, n_output) f32.
    """
    batch, n_feature = x.shape
    assert n_feature == params["n_feature"]
    w1_p, b1_p, w2_p, b2_p = params["w1"], params["b1"], params["w2"], params["b2"]
    f_p, h_p = w1_p.shape
    o_p = w2_p.shape[1]
    n_output = params["n_output"]

    vmem_budget = 40 * 1024 * 1024          # safe on v7x (64 MiB physical) and v5e/v6e
    tb = _choose_tb(batch, f_p, h_p, o_p, vmem_budget)
    b_p = _round_up(batch, tb)

    # Pad x in f32 only when actually needed (no separate bf16 cast pass — the kernel
    # casts on-chip).
    if (b_p, f_p) != (batch, n_feature):
        x = jnp.pad(x, ((0, b_p - batch), (0, f_p - n_feature)))

    grid = (b_p // tb,)
    vmem_limit = int(min(max(1.5 * _vmem_estimate(tb, f_p, h_p, o_p), 16 * 2**20),
                         48 * 2**20))

    out_padded = pl.pallas_call(
        mlp_kernel,
        out_shape=jax.ShapeDtypeStruct((b_p, o_p), jnp.float32),
        grid=grid,
        in_specs=[
            pl.BlockSpec((tb, f_p), lambda i: (i, 0)),   # x tile, pipelined over batch
            pl.BlockSpec((f_p, h_p), lambda i: (0, 0)),  # W1 resident across the grid
            pl.BlockSpec((1, h_p), lambda i: (0, 0)),    # b1 resident
            pl.BlockSpec((h_p, o_p), lambda i: (0, 0)),  # W2 resident
            pl.BlockSpec((1, o_p), lambda i: (0, 0)),    # b2 resident
        ],
        out_specs=pl.BlockSpec((tb, o_p), lambda i: (i, 0)),
        compiler_params=pltpu.CompilerParams(
            dimension_semantics=("parallel",),
            vmem_limit_bytes=vmem_limit,
        ),
    )(x, w1_p, b1_p, w2_p, b2_p)

    # Slice away batch / lane padding outside the kernel (skipped when not needed).
    if (b_p, o_p) != (batch, n_output):
        out_padded = out_padded[:batch, :n_output]
    return out_padded


def init_params(key, n_feature, n_hidden, n_output):
    """Deterministic init mirroring torch.nn.Linear's default U(-1/sqrt(fan_in), +)."""
    k1, k2, k3, k4 = jax.random.split(key, 4)
    bound1 = 1.0 / jnp.sqrt(n_feature)
    bound2 = 1.0 / jnp.sqrt(n_hidden)
    w1 = jax.random.uniform(k1, (n_feature, n_hidden), jnp.float32, -bound1, bound1)
    b1 = jax.random.uniform(k2, (n_hidden,), jnp.float32, -bound1, bound1)
    w2 = jax.random.uniform(k3, (n_hidden, n_output), jnp.float32, -bound2, bound2)
    b2 = jax.random.uniform(k4, (n_output,), jnp.float32, -bound2, bound2)
    return w1, b1, w2, b2


if __name__ == "__main__":
    # Small shapes consistent with the module: Net(n_feature, n_hidden, n_output).
    batch, n_feature, n_hidden, n_output = 64, 4, 32, 4

    key = jax.random.PRNGKey(0)
    kx, kp = jax.random.split(key)
    x = jax.random.normal(kx, (batch, n_feature), jnp.float32)
    w1, b1, w2, b2 = init_params(kp, n_feature, n_hidden, n_output)

    # One-time weight prep (hoisted out of the per-call path).
    params = prepare_params(w1, b1, w2, b2)
    params = jax.tree_util.tree_map(
        lambda a: jax.block_until_ready(a) if isinstance(a, jax.Array) else a, params)

    out = net_forward(x, params)
    out = jax.block_until_ready(out)

    # Sanity check against a plain-JAX f32 reference of the same forward pass.
    # (bf16 MXU inputs => loosened tolerance.)
    ref = jnp.maximum(x @ w1 + b1, 0.0) @ w2 + b2
    assert out.shape == (batch, n_output)
    assert jnp.allclose(out, ref, atol=3e-2, rtol=3e-2), float(jnp.max(jnp.abs(out - ref)))

    print("KERNEL_OK")
</pallas_src>

<mosaic_0001>
module attributes {stable_mosaic.version = 11 : i64} {
  func.func @mlp_kernel(%arg0: i32, %arg1: memref<32x128xf32, #tpu.memory_space<vmem>>, %arg2: memref<128x128xbf16, #tpu.memory_space<vmem>>, %arg3: memref<1x128xf32, #tpu.memory_space<vmem>>, %arg4: memref<128x128xbf16, #tpu.memory_space<vmem>>, %arg5: memref<1x128xf32, #tpu.memory_space<vmem>>, %arg6: memref<32x128xf32, #tpu.memory_space<vmem>>) attributes {dimension_semantics = [#tpu.dimension_semantics<parallel>], iteration_bounds = array<i64: 2>, scalar_prefetch = 0 : i64, scratch_operands = 0 : i64, tpu.core_type = #tpu.core_type<tc>, window_params = [{transform_indices = @transform_0, window_bounds = array<i64: 32, 128>}, {pipeline_mode = #tpu.pipeline_mode<synchronous>, transform_indices = @transform_1, window_bounds = array<i64: 128, 128>}, {pipeline_mode = #tpu.pipeline_mode<synchronous>, transform_indices = @transform_2, window_bounds = array<i64: 1, 128>}, {pipeline_mode = #tpu.pipeline_mode<synchronous>, transform_indices = @transform_3, window_bounds = array<i64: 128, 128>}, {pipeline_mode = #tpu.pipeline_mode<synchronous>, transform_indices = @transform_4, window_bounds = array<i64: 1, 128>}, {transform_indices = @transform_5, window_bounds = array<i64: 32, 128>}]} {
    %c0 = arith.constant 0 : index
    %c0_0 = arith.constant 0 : index
    %0 = vector.load %arg1[%c0, %c0_0] : memref<32x128xf32, #tpu.memory_space<vmem>>, vector<32x128xf32>
    %1 = arith.truncf %0 : vector<32x128xf32> to vector<32x128xbf16>
    %c0_1 = arith.constant 0 : index
    %c0_2 = arith.constant 0 : index
    %2 = vector.load %arg2[%c0_1, %c0_2] : memref<128x128xbf16, #tpu.memory_space<vmem>>, vector<128x128xbf16>
    %cst = arith.constant dense<0.000000e+00> : vector<32x128xf32>
    %3 = tpu.matmul %1, %2, %cst {dimension_numbers = #tpu.dot_dimension_numbers<[1], [0], [0], [1], [0, 0, 1, 1], [], []>} : vector<32x128xbf16>, vector<128x128xbf16>, vector<32x128xf32> -> vector<32x128xf32>
    %c0_3 = arith.constant 0 : index
    %c0_4 = arith.constant 0 : index
    %4 = vector.load %arg3[%c0_3, %c0_4] : memref<1x128xf32, #tpu.memory_space<vmem>>, vector<1x128xf32>
    %5 = vector.broadcast %4 : vector<1x128xf32> to vector<32x128xf32>
    %6 = arith.addf %3, %5 : vector<32x128xf32>
    %cst_5 = arith.constant 0.000000e+00 : f32
    %7 = vector.broadcast %cst_5 : f32 to vector<32x128xf32>
    %8 = arith.maximumf %6, %7 : vector<32x128xf32>
    %9 = arith.truncf %8 : vector<32x128xf32> to vector<32x128xbf16>
    %c0_6 = arith.constant 0 : index
    %c0_7 = arith.constant 0 : index
    %10 = vector.load %arg4[%c0_6, %c0_7] : memref<128x128xbf16, #tpu.memory_space<vmem>>, vector<128x128xbf16>
    %cst_8 = arith.constant dense<0.000000e+00> : vector<32x128xf32>
    %11 = tpu.matmul %9, %10, %cst_8 {dimension_numbers = #tpu.dot_dimension_numbers<[1], [0], [0], [1], [0, 0, 1, 1], [], []>} : vector<32x128xbf16>, vector<128x128xbf16>, vector<32x128xf32> -> vector<32x128xf32>
    %c0_9 = arith.constant 0 : index
    %c0_10 = arith.constant 0 : index
    %12 = vector.load %arg5[%c0_9, %c0_10] : memref<1x128xf32, #tpu.memory_space<vmem>>, vector<1x128xf32>
    %13 = vector.broadcast %12 : vector<1x128xf32> to vector<32x128xf32>
    %14 = arith.addf %11, %13 : vector<32x128xf32>
    %c0_11 = arith.constant 0 : index
    %c0_12 = arith.constant 0 : index
    %15 = vector.load %arg6[%c0_11, %c0_12] : memref<32x128xf32, #tpu.memory_space<vmem>>, vector<32x128xf32>
    tpu.vector_store %arg6[%c0_11, %c0_12], %14 {strides = array<i32>} : memref<32x128xf32, #tpu.memory_space<vmem>>, vector<32x128xf32>,
    return
  }
  func.func @transform_0(%arg0: i32) -> (i32, i32) {
    %c0_i32 = arith.constant 0 : i32
    %c0_i32_0 = arith.constant 0 : i32
    return %arg0, %c0_i32 : i32, i32
  }
  func.func @transform_1(%arg0: i32) -> (i32, i32) {
    %c0_i32 = arith.constant 0 : i32
    %c0_i32_0 = arith.constant 0 : i32
    %c0_i32_1 = arith.constant 0 : i32
    return %c0_i32, %c0_i32_0 : i32, i32
  }
  func.func @transform_2(%arg0: i32) -> (i32, i32) {
    %c0_i32 = arith.constant 0 : i32
    %c0_i32_0 = arith.constant 0 : i32
    %c0_i32_1 = arith.constant 0 : i32
    return %c0_i32, %c0_i32_0 : i32, i32
  }
  func.func @transform_3(%arg0: i32) -> (i32, i32) {
    %c0_i32 = arith.constant 0 : i32
    %c0_i32_0 = arith.constant 0 : i32
    %c0_i32_1 = arith.constant 0 : i32
    return %c0_i32, %c0_i32_0 : i32, i32
  }
  func.func @transform_4(%arg0: i32) -> (i32, i32) {
    %c0_i32 = arith.constant 0 : i32
    %c0_i32_0 = arith.constant 0 : i32
    %c0_i32_1 = arith.constant 0 : i32
    return %c0_i32, %c0_i32_0 : i32, i32
  }
  func.func @transform_5(%arg0: i32) -> (i32, i32) {
    %c0_i32 = arith.constant 0 : i32
    %c0_i32_0 = arith.constant 0 : i32
    return %arg0, %c0_i32 : i32, i32
  }
}

</mosaic_0001>

<llo_original>
// kernel: tpu_custom_call.1
$region0: #{tpu_custom_call.1}
  #allocation0 [shape = 'u32[]', space=smem, size = 0x4, offset = 0x4, fixed_abs, tag = 'smem constant byte address 0x4 - core index']
  #allocation1 [shape = 'u32[144,128]{1,0:T(1,128)}', space=vmem, size = 0x12000, scoped, tag = 'internal scratch']
  %s0 = inlined_call_operand.hbm [shape: f32[64,128], index: 0, kind: input, shape index: {}]
  %s1 = inlined_call_operand.hbm [shape: bf16[128,128], index: 1, kind: input, shape index: {}]
  %s2 = inlined_call_operand.vmem [shape: f32[1,128], index: 2, kind: input, shape index: {}]
  %s3 = inlined_call_operand.hbm [shape: bf16[128,128], index: 3, kind: input, shape index: {}]
  %s4 = inlined_call_operand.vmem [shape: f32[1,128], index: 4, kind: input, shape index: {}]
  %s5 = inlined_call_operand.hbm [shape: f32[64,128], index: 5, kind: output, shape index: {}]
  %s6 = sld [smem:[#allocation0]]
  $region65: #{tpu_custom_call.1} parent=0
    _
  %s8 = ssub.s32 1, %s6
  %s9 = scalar_select 0, %s8, %s6
  $region1: #{tpu_custom_call.1} parent=0
    #allocation2 [shape = 'u8[32768]{0}', space=vmem, size = 0x8000, scoped, tag = 'input window, operand 0']
    #allocation3 [shape = 's32[2]{0}', space=sflag, size = 0x8, scoped, tag = 'scoped memory for tpu_custom_call.1']
    #allocation4 [shape = 's32[2]{0}', space=sflag, size = 0x8, scoped, tag = 'scoped memory for tpu_custom_call.1']
    #allocation5 [shape = 'u8[32768]{0}', space=vmem, size = 0x8000, scoped, tag = 'input window, operand 1, single buffered']
    #allocation6 [shape = 's32[1]{0}', space=sflag, size = 0x4, scoped, tag = 'scoped memory for tpu_custom_call.1']
    #allocation7 [shape = 'u8[32768]{0}', space=vmem, size = 0x8000, scoped, tag = 'input window, operand 3, single buffered']
    #allocation8 [shape = 'u8[32768]{0}', space=vmem, size = 0x8000, scoped, tag = 'output window, operand 0']
    %10 = vsyncpa [#allocation3], 0
    %s11 = scalar_lea.sflag [#allocation3], 1
    %12 = vsyncpa %s11, 0
    %13 = vsyncpa [#allocation6], 0
    %14 = vsyncpa [#allocation4], 0
    %s15 = scalar_lea.sflag [#allocation4], 1
    %16 = vsyncpa %s15, 0
    loop: start=0, step=1, limit=4
    $region2: #{tpu_custom_call.1} parent=1 // loop_pre_header
      _
    $region3: #{tpu_custom_call.1} parent=1 // loop_header
      %s18 = sphi 0, %s22
      %p19 = scmp.ge.s32.totalorder %s18, 4
      %s28 = sphi 0, %s30
      %s31 = sphi 0, %s28
      %s32 = sphi 0, %s31
      %s48 = sphi 0, %s32
      %s52 = sphi 0, %s52
      %s54 = sphi 0, %s52
      %s55 = sphi 0, %s54
      %s69 = sphi 0, %s55
      %s73 = sphi 0, %s73
      %s75 = sphi 0, %s73
      %s76 = sphi 0, %s75
      %s90 = sphi 0, %s76
      %s94 = sphi 0, %s94
      %s96 = sphi 0, %s94
      %s97 = sphi 0, %s96
      %s111 = sphi 0, %s97
      %s115 = sphi 0, %s115
      %s117 = sphi 0, %s115
      %s118 = sphi 0, %s117
      %s132 = sphi 0, %s118
      %s138 = sphi 0, %s140
      %s141 = sphi 0, %s138
      %s142 = sphi 0, %s141
      %s158 = sphi 0, %s142
    $region4: #{tpu_custom_call.1} parent=1 // loop_header_branch
      %21 = sbr.rel (%p19) target = $region8
    $region5: #{tpu_custom_call.1} parent=1 // loop_body
      %s23 = ssub.s32 %s18, 1
      %s24 = ssub.s32 %s18, 2
      %s25 = sadd.s32 %s18, 1
      %s26 = ssub.s32 %s18, %s25
      %p27 = scmp.eq.s32.totalorder %s26, 0
      %s29 = sadd.s32 %s28, 1
      %s30 = scalar_select %p27, %s28, %s29
      %p33 = pneg %p27
      %p34 = scmp.eq.s32.totalorder %s18, 1
      %p35 = por %p33, %p34
      %p36 = scmp.ne.s32.totalorder %s28, %s31
      %p37 = scmp.eq.s32.totalorder %s18, 0
      %p38 = por %p36, %p37
      %p39 = scmp.ne.s32.totalorder %s28, %s31
      %p40 = scmp.eq.s32.totalorder %s23, 1
      %p41 = por %p39, %p40
      %p42 = scmp.ne.s32.totalorder %s31, %s32
      %p43 = scmp.eq.s32.totalorder %s23, 0
      %p44 = por %p42, %p43
      %p45 = scmp.ne.s32.totalorder %s31, %s32
      %p46 = scmp.eq.s32.totalorder %s24, 1
      %p47 = por %p45, %p46
      %p49 = scmp.ne.s32.totalorder %s32, %s48
      %p50 = scmp.eq.s32.totalorder %s24, 0
      %p51 = por %p49, %p50
      %s53 = sadd.s32 %s52, 1
      %p56 = scmp.eq.s32.totalorder %s18, 1
      %p57 = scmp.ne.s32.totalorder %s52, %s54
      %p58 = scmp.eq.s32.totalorder %s18, 0
      %p59 = por %p57, %p58
      %p60 = scmp.ne.s32.totalorder %s52, %s54
      %p61 = scmp.eq.s32.totalorder %s23, 1
      %p62 = por %p60, %p61
      %p63 = scmp.ne.s32.totalorder %s54, %s55
      %p64 = scmp.eq.s32.totalorder %s23, 0
      %p65 = por %p63, %p64
      %p66 = scmp.ne.s32.totalorder %s54, %s55
      %p67 = scmp.eq.s32.totalorder %s24, 1
      %p68 = por %p66, %p67
      %p70 = scmp.ne.s32.totalorder %s55, %s69
      %p71 = scmp.eq.s32.totalorder %s24, 0
      %p72 = por %p70, %p71
      %s74 = sadd.s32 %s73, 1
      %p77 = scmp.eq.s32.totalorder %s18, 1
      %p78 = scmp.ne.s32.totalorder %s73, %s75
      %p79 = scmp.eq.s32.totalorder %s18, 0
      %p80 = por %p78, %p79
      %p81 = scmp.ne.s32.totalorder %s73, %s75
      %p82 = scmp.eq.s32.totalorder %s23, 1
      %p83 = por %p81, %p82
      %p84 = scmp.ne.s32.totalorder %s75, %s76
      %p85 = scmp.eq.s32.totalorder %s23, 0
      %p86 = por %p84, %p85
      %p87 = scmp.ne.s32.totalorder %s75, %s76
      %p88 = scmp.eq.s32.totalorder %s24, 1
      %p89 = por %p87, %p88
      %p91 = scmp.ne.s32.totalorder %s76, %s90
      %p92 = scmp.eq.s32.totalorder %s24, 0
      %p93 = por %p91, %p92
      %s95 = sadd.s32 %s94, 1
      %p98 = scmp.eq.s32.totalorder %s18, 1
      %p99 = scmp.ne.s32.totalorder %s94, %s96
      %p100 = scmp.eq.s32.totalorder %s18, 0
      %p101 = por %p99, %p100
      %p102 = scmp.ne.s32.totalorder %s94, %s96
      %p103 = scmp.eq.s32.totalorder %s23, 1
      %p104 = por %p102, %p103
      %p105 = scmp.ne.s32.totalorder %s96, %s97
      %p106 = scmp.eq.s32.totalorder %s23, 0
      %p107 = por %p105, %p106
      %p108 = scmp.ne.s32.totalorder %s96, %s97
      %p109 = scmp.eq.s32.totalorder %s24, 1
      %p110 = por %p108, %p109
      %p112 = scmp.ne.s32.totalorder %s97, %s111
      %p113 = scmp.eq.s32.totalorder %s24, 0
      %p114 = por %p112, %p113
      %s116 = sadd.s32 %s115, 1
      %p119 = scmp.eq.s32.totalorder %s18, 1
      %p120 = scmp.ne.s32.totalorder %s115, %s117
      %p121 = scmp.eq.s32.totalorder %s18, 0
      %p122 = por %p120, %p121
      %p123 = scmp.ne.s32.totalorder %s115, %s117
      %p124 = scmp.eq.s32.totalorder %s23, 1
      %p125 = por %p123, %p124
      %p126 = scmp.ne.s32.totalorder %s117, %s118
      %p127 = scmp.eq.s32.totalorder %s23, 0
      %p128 = por %p126, %p127
      %p129 = scmp.ne.s32.totalorder %s117, %s118
      %p130 = scmp.eq.s32.totalorder %s24, 1
      %p131 = por %p129, %p130
      %p133 = scmp.ne.s32.totalorder %s118, %s132
      %p134 = scmp.eq.s32.totalorder %s24, 0
      %p135 = por %p133, %p134
      %s136 = ssub.s32 %s18, %s25
      %p137 = scmp.eq.s32.totalorder %s136, 0
      %s139 = sadd.s32 %s138, 1
      %s140 = scalar_select %p137, %s138, %s139
      %p143 = pneg %p137
      %p144 = scmp.eq.s32.totalorder %s18, 1
      %p145 = por %p143, %p144
      %p146 = scmp.ne.s32.totalorder %s138, %s141
      %p147 = scmp.eq.s32.totalorder %s18, 0
      %p148 = por %p146, %p147
      %p149 = scmp.ne.s32.totalorder %s138, %s141
      %p150 = scmp.eq.s32.totalorder %s23, 1
      %p151 = por %p149, %p150
      %p152 = scmp.ne.s32.totalorder %s141, %s142
      %p153 = scmp.eq.s32.totalorder %s23, 0
      %p154 = por %p152, %p153
      %p155 = scmp.ne.s32.totalorder %s141, %s142
      %p156 = scmp.eq.s32.totalorder %s24, 1
      %p157 = por %p155, %p156
      %p159 = scmp.ne.s32.totalorder %s142, %s158
      %p160 = scmp.eq.s32.totalorder %s24, 0
      %p161 = por %p159, %p160
      %p162 = scmp.le.s32.totalorder 1, %s18
      %p163 = scmp.lt.s32.totalorder %s18, 3
      %p164 = pnand %p162, %p163
      %p165 = pneg %p164
      // Predicated region
      $region9: #{tpu_custom_call.1} parent=5 // pred_check
        _
      $region10: #{tpu_custom_call.1} parent=5 // pred_check_branch
        %167 = sbr.rel (%p164) target = $region12
      $region11: #{tpu_custom_call.1} parent=5 // pred_region
        %s168 = ssub.s32 %s18, 1
        // Predicated region
        $region13: #{tpu_custom_call.1} parent=11 // pred_check
          %p169 = pneg %p65
        $region14: #{tpu_custom_call.1} parent=11 // pred_check_branch
          %171 = sbr.rel (%p169) target = $region16
        $region15: #{tpu_custom_call.1} parent=11 // pred_region
          %s173 = ssub.s32 1024, 1024
          %174 = vsyncadd [#allocation6], %s173
          %s175 = sshll.u32 [#allocation5], 4
          %s176 = int_to_ptr.vmem [resolvable:$true] %s175
          %181 = dma.hbm_to_vmem [thread:$0]  %s1, 1024, %s176, [#allocation6], 64, 64, 4
        $region16: #{tpu_custom_call.1} parent=11 // pred_fallthru
          _
        // Predicated region
        $region17: #{tpu_custom_call.1} parent=11 // pred_check
          %p182 = pneg %p86
        $region18: #{tpu_custom_call.1} parent=11 // pred_check_branch
          %184 = sbr.rel (%p182) target = $region20
        $region19: #{tpu_custom_call.1} parent=11 // pred_region
          _
        $region20: #{tpu_custom_call.1} parent=11 // pred_fallthru
          _
        // Predicated region
        $region21: #{tpu_custom_call.1} parent=11 // pred_check
          %p185 = pneg %p107
        $region22: #{tpu_custom_call.1} parent=11 // pred_check_branch
          %187 = sbr.rel (%p185) target = $region24
        $region23: #{tpu_custom_call.1} parent=11 // pred_region
          %s189 = ssub.s32 1024, 1024
          %190 = vsyncadd [#allocation6], %s189
          %s191 = sshll.u32 [#allocation7], 4
          %s192 = int_to_ptr.vmem [resolvable:$true] %s191
          %197 = dma.hbm_to_vmem [thread:$0]  %s3, 1024, %s192, [#allocation6], 64, 64, 4
        $region24: #{tpu_custom_call.1} parent=11 // pred_fallthru
          _
        // Predicated region
        $region25: #{tpu_custom_call.1} parent=11 // pred_check
          %p198 = pneg %p128
        $region26: #{tpu_custom_call.1} parent=11 // pred_check_branch
          %200 = sbr.rel (%p198) target = $region28
        $region27: #{tpu_custom_call.1} parent=11 // pred_region
          _
        $region28: #{tpu_custom_call.1} parent=11 // pred_fallthru
          _
      $region12: #{tpu_custom_call.1} parent=5 // pred_fallthru
        _
      %p201 = scmp.lt.s32.totalorder %s18, 2
      // Predicated region
      $region29: #{tpu_custom_call.1} parent=5 // pred_check
        %p202 = pneg %p201
      $region30: #{tpu_custom_call.1} parent=5 // pred_check_branch
        %204 = sbr.rel (%p202) target = $region32
      $region31: #{tpu_custom_call.1} parent=5 // pred_region
        // Predicated region
        $region33: #{tpu_custom_call.1} parent=31 // pred_check
          %p205 = pneg %p38
        $region34: #{tpu_custom_call.1} parent=31 // pred_check_branch
          %207 = sbr.rel (%p205) target = $region36
        $region35: #{tpu_custom_call.1} parent=31 // pred_region
          %s208 = sand.u32 %s28, 1
          %s209 = scalar_lea.sflag [#allocation3], %s208
          %s210 = sand.u32 %s28, 1
          %s211 = smul.addr %s210, 32
          %s212 = scalar_lea.vmem [#allocation2], %s211
          %s213 = smul.u32 4, %s18
          %s215 = ssub.s32 512, 512
          %216 = vsyncadd %s209, %s215
          %s217 = smul.addr %s213, 128
          %s218 = scalar_lea.hbm %s0, %s217
          %s219 = sshll.u32 %s212, 4
          %s220 = int_to_ptr.vmem [resolvable:$true] %s219
          %225 = dma.hbm_to_vmem [thread:$0]  %s218, 512, %s220, %s209, 128, 128, 8
        $region36: #{tpu_custom_call.1} parent=31 // pred_fallthru
          _
      $region32: #{tpu_custom_call.1} parent=5 // pred_fallthru
        _
      %p226 = scmp.le.s32.totalorder 1, %s18
      %p227 = scmp.lt.s32.totalorder %s18, 3
      %p228 = pnand %p226, %p227
      %p229 = pneg %p228
      // Predicated region
      $region37: #{tpu_custom_call.1} parent=5 // pred_check
        _
      $region38: #{tpu_custom_call.1} parent=5 // pred_check_branch
        %231 = sbr.rel (%p228) target = $region40
      $region39: #{tpu_custom_call.1} parent=5 // pred_region
        %s232 = ssub.s32 %s18, 1
        %s233 = sand.u32 %s31, 1
        %s234 = scalar_lea.sflag [#allocation3], %s233
        %s235 = sand.u32 %s31, 1
        %s236 = smul.addr %s235, 32
        %s237 = scalar_lea.vmem [#allocation2], %s236
        // Predicated region
        $region41: #{tpu_custom_call.1} parent=39 // pred_check
          %p238 = pneg %p44
        $region42: #{tpu_custom_call.1} parent=39 // pred_check_branch
          %240 = sbr.rel (%p238) target = $region44
        $region43: #{tpu_custom_call.1} parent=39 // pred_region
          %241 = dma.done %s234, 512
        $region44: #{tpu_custom_call.1} parent=39 // pred_fallthru
          _
        // Predicated region
        $region45: #{tpu_custom_call.1} parent=39 // pred_check
          %p242 = pneg %p65
        $region46: #{tpu_custom_call.1} parent=39 // pred_check_branch
          %244 = sbr.rel (%p242) target = $region48
        $region47: #{tpu_custom_call.1} parent=39 // pred_region
          %245 = dma.done [#allocation6], 1024
        $region48: #{tpu_custom_call.1} parent=39 // pred_fallthru
          _
        // Predicated region
        $region49: #{tpu_custom_call.1} parent=39 // pred_check
          %p246 = pneg %p107
        $region50: #{tpu_custom_call.1} parent=39 // pred_check_branch
          %248 = sbr.rel (%p246) target = $region52
        $region51: #{tpu_custom_call.1} parent=39 // pred_region
          %249 = dma.done [#allocation6], 1024
        $region52: #{tpu_custom_call.1} parent=39 // pred_fallthru
          _
        %s250 = sand.u32 %s31, 1
        %s251 = scalar_lea.sflag [#allocation3], %s250
        %s252 = sand.u32 %s31, 1
        %s253 = smul.addr %s252, 32
        %s254 = scalar_lea.vmem [#allocation2], %s253
        %p255 = pneg %p44
        %p256 = pneg %p41
        %p257 = pneg %p65
        %p258 = pneg %p62
        %p259 = pneg %p86
        %p260 = pneg %p83
        %p261 = pneg %p107
        %p262 = pneg %p104
        %p263 = pneg %p128
        %p264 = pneg %p125
        %p265 = pneg %p154
        %p266 = pneg %p151
        %s267 = sand.u32 %s141, 1
        %s268 = scalar_lea.sflag [#allocation4], %s267
        %s269 = sand.u32 %s141, 1
        %s270 = smul.addr %s269, 32
        %s271 = scalar_lea.vmem [#allocation8], %s270
        %s272 = smul.u32 4, %s23
        %s273 = smul.u32 4, %s23
        %v275 = vld [vmem:[%s237] sm:$0xff]
        %v276 = vld [vmem:[%s237 + $0x8] sm:$0xff]
        %v277 = vld [vmem:[%s237 + $0x10] sm:$0xff]
        %v278 = vld [vmem:[%s237 + $0x18] sm:$0xff]
        %v279 = vpack.c.bf16 %v276, %v275
        %v280 = vpack.c.bf16 %v278, %v277
        %v281 = vld [vmem:[#allocation5] sm:$0xf]
        %v282 = vld [vmem:[#allocation5 + $0x4] sm:$0xf]
        %v283 = vld [vmem:[#allocation5 + $0x8] sm:$0xf]
        %v284 = vld [vmem:[#allocation5 + $0xc] sm:$0xf]
        %v285 = vld [vmem:[#allocation5 + $0x10] sm:$0xf]
        %v286 = vld [vmem:[#allocation5 + $0x14] sm:$0xf]
        %v287 = vld [vmem:[#allocation5 + $0x18] sm:$0xf]
        %v288 = vld [vmem:[#allocation5 + $0x1c] sm:$0xf]
        %v289 = vld [vmem:[#allocation5 + $0x20] sm:$0xf]
        %v290 = vld [vmem:[#allocation5 + $0x24] sm:$0xf]
        %v291 = vld [vmem:[#allocation5 + $0x28] sm:$0xf]
        %v292 = vld [vmem:[#allocation5 + $0x2c] sm:$0xf]
        %v293 = vld [vmem:[#allocation5 + $0x30] sm:$0xf]
        %v294 = vld [vmem:[#allocation5 + $0x34] sm:$0xf]
        %v295 = vld [vmem:[#allocation5 + $0x38] sm:$0xf]
        %v296 = vld [vmem:[#allocation5 + $0x3c] sm:$0xf]
        %v297 = vld [vmem:[%s2] sm:$0x1]
        %v299 = vlaneseq
        %v300 = vshrl.u32 %v299, 7
        %v301 = vsub.s32 0, %v300
        %v302 = vrot.slane %v297, %v301
        %v320 = vunpack.c.l.b16 %v281
        %v321 = vunpack.c.l.b16 %v282
        %v322 = vunpack.c.l.b16 %v283
        %v323 = vunpack.c.l.b16 %v284
        %v324 = vunpack.c.l.b16 %v285
        %v325 = vunpack.c.l.b16 %v286
        %v326 = vunpack.c.l.b16 %v287
        %v327 = vunpack.c.l.b16 %v288
        %v328 = vunpack.c.l.b16 %v289
        %v329 = vunpack.c.l.b16 %v290
        %v330 = vunpack.c.l.b16 %v291
        %v331 = vunpack.c.l.b16 %v292
        %v332 = vunpack.c.l.b16 %v293
        %v333 = vunpack.c.l.b16 %v294
        %v334 = vunpack.c.l.b16 %v295
        %v335 = vunpack.c.l.b16 %v296
        %v336 = vpack.c.b16 %v321, %v320
        %v337 = vpack.c.b16 %v323, %v322
        %v338 = vpack.c.b16 %v325, %v324
        %v339 = vpack.c.b16 %v327, %v326
        %v340 = vpack.c.b16 %v329, %v328
        %v341 = vpack.c.b16 %v331, %v330
        %v342 = vpack.c.b16 %v333, %v332
        %v343 = vpack.c.b16 %v335, %v334
        %352 = vmatprep.subr.bf16.mxu0 0
        %353 = vmatpush1.bf16.msra.mxu0 %v336
        %354 = vmatprep.subr.bf16.mxu0 0
        %355 = vmatpush1.bf16.msra.mxu0 %v337
        %356 = vmatprep.subr.bf16.mxu0 0
        %357 = vmatpush1.bf16.msra.mxu0 %v338
        %358 = vmatprep.subr.bf16.mxu0 0
        %359 = vmatpush1.bf16.msra.mxu0 %v339
        %360 = vmatprep.subr.bf16.mxu0 0
        %361 = vmatpush1.bf16.msra.mxu0 %v340
        %362 = vmatprep.subr.bf16.mxu0 0
        %363 = vmatpush1.bf16.msra.mxu0 %v341
        %364 = vmatprep.subr.bf16.mxu0 0
        %365 = vmatpush1.bf16.msra.mxu0 %v342
        %366 = vmatprep.subr.bf16.mxu0 0
        %367 = vmatpush1.bf16.msra.mxu0 %v343
        %368 = vmatprep.subr.bf16.mxu0 0
        %369 = vmatpush1.bf16.msra.mxu0 0
        %370 = vmatprep.subr.bf16.mxu0 0
        %371 = vmatpush1.bf16.msra.mxu0 0
        %372 = vmatprep.subr.bf16.mxu0 0
        %373 = vmatpush1.bf16.msra.mxu0 0
        %374 = vmatprep.subr.bf16.mxu0 0
        %375 = vmatpush1.bf16.msra.mxu0 0
        %376 = vmatprep.subr.bf16.mxu0 0
        %377 = vmatpush1.bf16.msra.mxu0 0
        %378 = vmatprep.subr.bf16.mxu0 0
        %379 = vmatpush1.bf16.msra.mxu0 0
        %380 = vmatprep.subr.bf16.mxu0 0
        %381 = vmatpush1.bf16.msra.mxu0 0
        %382 = vmatprep.subr.bf16.mxu0 0
        %383 = vmatpush1.bf16.msra.mxu0 0
        %384 = vmatprep.mubr.bf16.mxu0 0
        %385 = vmatmul.mubr.bf16.gmra.mrb[0].mxu0 %v279
        %v386 = vpop.f32.mrb[0].mxu0
        %v387 = vadd.f32 %v302, %v386
        %v388 = vpop.f32.mrb[0].mxu0
        %v389 = vpop.f32.mrb[0].mxu0
        %v390 = vadd.f32 %v302, %v389
        %v391 = vpop.f32.mrb[0].mxu0
        %392 = vmatprep.mubr.bf16.mxu0 0
        %393 = vmatmul.mubr.bf16.gmra.mrb[0].mxu0 %v280
        %v394 = vpop.f32.mrb[0].mxu0
        %v395 = vadd.f32 %v302, %v394
        %v396 = vpop.f32.mrb[0].mxu0
        %v397 = vpop.f32.mrb[0].mxu0
        %v398 = vadd.f32 %v302, %v397
        %v399 = vpop.f32.mrb[0].mxu0
        %400 = vdwg.mxu0
        %v401 = vmax.f32 %v387, 0.0
        %v402 = vmax.f32 %v390, 0.0
        %v403 = vmax.f32 %v395, 0.0
        %v404 = vmax.f32 %v398, 0.0
        %v405 = vpack.c.bf16 %v402, %v401
        %v406 = vpack.c.bf16 %v404, %v403
        %v407 = vld [vmem:[#allocation7] sm:$0xf]
        %v408 = vld [vmem:[#allocation7 + $0x4] sm:$0xf]
        %v409 = vld [vmem:[#allocation7 + $0x8] sm:$0xf]
        %v410 = vld [vmem:[#allocation7 + $0xc] sm:$0xf]
        %v411 = vld [vmem:[#allocation7 + $0x10] sm:$0xf]
        %v412 = vld [vmem:[#allocation7 + $0x14] sm:$0xf]
        %v413 = vld [vmem:[#allocation7 + $0x18] sm:$0xf]
        %v414 = vld [vmem:[#allocation7 + $0x1c] sm:$0xf]
        %v415 = vld [vmem:[#allocation7 + $0x20] sm:$0xf]
        %v416 = vld [vmem:[#allocation7 + $0x24] sm:$0xf]
        %v417 = vld [vmem:[#allocation7 + $0x28] sm:$0xf]
        %v418 = vld [vmem:[#allocation7 + $0x2c] sm:$0xf]
        %v419 = vld [vmem:[#allocation7 + $0x30] sm:$0xf]
        %v420 = vld [vmem:[#allocation7 + $0x34] sm:$0xf]
        %v421 = vld [vmem:[#allocation7 + $0x38] sm:$0xf]
        %v422 = vld [vmem:[#allocation7 + $0x3c] sm:$0xf]
        %v423 = vld [vmem:[%s4] sm:$0x1]
        %v425 = vlaneseq
        %v426 = vshrl.u32 %v425, 7
        %v427 = vsub.s32 0, %v426
        %v428 = vrot.slane %v423, %v427
        %v446 = vunpack.c.l.b16 %v407
        %v447 = vunpack.c.l.b16 %v408
        %v448 = vunpack.c.l.b16 %v409
        %v449 = vunpack.c.l.b16 %v410
        %v450 = vunpack.c.l.b16 %v411
        %v451 = vunpack.c.l.b16 %v412
        %v452 = vunpack.c.l.b16 %v413
        %v453 = vunpack.c.l.b16 %v414
        %v454 = vunpack.c.l.b16 %v415
        %v455 = vunpack.c.l.b16 %v416
        %v456 = vunpack.c.l.b16 %v417
        %v457 = vunpack.c.l.b16 %v418
        %v458 = vunpack.c.l.b16 %v419
        %v459 = vunpack.c.l.b16 %v420
        %v460 = vunpack.c.l.b16 %v421
        %v461 = vunpack.c.l.b16 %v422
        %v462 = vpack.c.b16 %v447, %v446
        %v463 = vpack.c.b16 %v449, %v448
        %v464 = vpack.c.b16 %v451, %v450
        %v465 = vpack.c.b16 %v453, %v452
        %v466 = vpack.c.b16 %v455, %v454
        %v467 = vpack.c.b16 %v457, %v456
        %v468 = vpack.c.b16 %v459, %v458
        %v469 = vpack.c.b16 %v461, %v460
        %478 = vmatprep.subr.bf16.mxu0 0
        %479 = vmatpush1.bf16.msra.mxu0 %v462
        %480 = vmatprep.subr.bf16.mxu0 0
        %481 = vmatpush1.bf16.msra.mxu0 %v463
        %482 = vmatprep.subr.bf16.mxu0 0
        %483 = vmatpush1.bf16.msra.mxu0 %v464
        %484 = vmatprep.subr.bf16.mxu0 0
        %485 = vmatpush1.bf16.msra.mxu0 %v465
        %486 = vmatprep.subr.bf16.mxu0 0
        %487 = vmatpush1.bf16.msra.mxu0 %v466
        %488 = vmatprep.subr.bf16.mxu0 0
        %489 = vmatpush1.bf16.msra.mxu0 %v467
        %490 = vmatprep.subr.bf16.mxu0 0
        %491 = vmatpush1.bf16.msra.mxu0 %v468
        %492 = vmatprep.subr.bf16.mxu0 0
        %493 = vmatpush1.bf16.msra.mxu0 %v469
        %494 = vmatprep.subr.bf16.mxu0 0
        %495 = vmatpush1.bf16.msra.mxu0 0
        %496 = vmatprep.subr.bf16.mxu0 0
        %497 = vmatpush1.bf16.msra.mxu0 0
        %498 = vmatprep.subr.bf16.mxu0 0
        %499 = vmatpush1.bf16.msra.mxu0 0
        %500 = vmatprep.subr.bf16.mxu0 0
        %501 = vmatpush1.bf16.msra.mxu0 0
        %502 = vmatprep.subr.bf16.mxu0 0
        %503 = vmatpush1.bf16.msra.mxu0 0
        %504 = vmatprep.subr.bf16.mxu0 0
        %505 = vmatpush1.bf16.msra.mxu0 0
        %506 = vmatprep.subr.bf16.mxu0 0
        %507 = vmatpush1.bf16.msra.mxu0 0
        %508 = vmatprep.subr.bf16.mxu0 0
        %509 = vmatpush1.bf16.msra.mxu0 0
        %510 = vmatprep.mubr.bf16.mxu0 0
        %511 = vmatmul.mubr.bf16.gmra.mrb[0].mxu0 %v405
        %v512 = vpop.f32.mrb[0].mxu0
        %v513 = vadd.f32 %v428, %v512
        %v514 = vpop.f32.mrb[0].mxu0
        %v515 = vpop.f32.mrb[0].mxu0
        %v516 = vadd.f32 %v428, %v515
        %v517 = vpop.f32.mrb[0].mxu0
        %518 = vmatprep.mubr.bf16.mxu0 0
        %519 = vmatmul.mubr.bf16.gmra.mrb[0].mxu0 %v406
        %v520 = vpop.f32.mrb[0].mxu0
        %v521 = vadd.f32 %v428, %v520
        %v522 = vpop.f32.mrb[0].mxu0
        %v523 = vpop.f32.mrb[0].mxu0
        %v524 = vadd.f32 %v428, %v523
        %v525 = vpop.f32.mrb[0].mxu0
        %526 = vdwg.mxu0
        %527 = vst [vmem:[%s271] sm:$0xff] %v513
        %528 = vst [vmem:[%s271 + $0x8] sm:$0xff] %v516
        %529 = vst [vmem:[%s271 + $0x10] sm:$0xff] %v521
        %530 = vst [vmem:[%s271 + $0x18] sm:$0xff] %v524
        %s531 = sand.u32 %s141, 1
        %s532 = scalar_lea.sflag [#allocation4], %s531
        %s533 = sand.u32 %s141, 1
        %s534 = smul.addr %s533, 32
        %s535 = scalar_lea.vmem [#allocation8], %s534
        // Predicated region
        $region53: #{tpu_custom_call.1} parent=39 // pred_check
          %p536 = pneg %p151
        $region54: #{tpu_custom_call.1} parent=39 // pred_check_branch
          %538 = sbr.rel (%p536) target = $region56
        $region55: #{tpu_custom_call.1} parent=39 // pred_region
          %s539 = smul.u32 4, %s23
          %s541 = ssub.s32 512, 512
          %542 = vsyncadd %s532, %s541
          %s543 = smul.addr %s539, 128
          %s544 = scalar_lea.hbm %s5, %s543
          %s545 = sshll.u32 %s535, 4
          %s546 = int_to_ptr.vmem [resolvable:$true] %s545
          %551 = dma.vmem_to_hbm [thread:$0]  %s546, 512, %s544, %s532, 128, 128, 8
        $region56: #{tpu_custom_call.1} parent=39 // pred_fallthru
          _
      $region40: #{tpu_custom_call.1} parent=5 // pred_fallthru
        _
      %p552 = scmp.le.s32.totalorder 2, %s18
      // Predicated region
      $region57: #{tpu_custom_call.1} parent=5 // pred_check
        %p553 = pneg %p552
      $region58: #{tpu_custom_call.1} parent=5 // pred_check_branch
        %555 = sbr.rel (%p553) target = $region60
      $region59: #{tpu_custom_call.1} parent=5 // pred_region
        %s556 = ssub.s32 %s18, 2
        // Predicated region
        $region61: #{tpu_custom_call.1} parent=59 // pred_check
          %p557 = pneg %p157
        $region62: #{tpu_custom_call.1} parent=59 // pred_check_branch
          %559 = sbr.rel (%p557) target = $region64
        $region63: #{tpu_custom_call.1} parent=59 // pred_region
          %s560 = sand.u32 %s142, 1
          %s561 = scalar_lea.sflag [#allocation4], %s560
          %s562 = sand.u32 %s142, 1
          %s563 = smul.addr %s562, 32
          %s564 = scalar_lea.vmem [#allocation8], %s563
          %565 = dma.done %s561, 512
        $region64: #{tpu_custom_call.1} parent=59 // pred_fallthru
          _
      $region60: #{tpu_custom_call.1} parent=5 // pred_fallthru
        _
    $region6: #{tpu_custom_call.1} parent=1 // loop_footer
      %s22 = sadd.s32 1, %s18
    $region7: #{tpu_custom_call.1} parent=1 // loop_footer_branch
      %17 = sbr.rel target = $region3
    $region8: #{tpu_custom_call.1} parent=1 // loop_exit
      _
    %566 = vsyncpa [#allocation3], 1
    %s567 = scalar_lea.sflag [#allocation3], 1
    %568 = vsyncpa %s567, 1
    %569 = vsyncpa [#allocation6], 1
    %570 = vsyncpa [#allocation4], 1
    %s571 = scalar_lea.sflag [#allocation4], 1
    %572 = vsyncpa %s571, 1

</llo_original>
